<compile_context>
chip_gen: v5e
topology: v5e:2x2
jax: 0.10.0
libtpu: 0.0.40
codegen_flags: <defaults>
</compile_context>

<pallas_src>
import functools

import jax
import jax.numpy as jnp
from jax.experimental import pallas as pl
from jax.experimental.pallas import tpu as pltpu


def relocate_kernel(ctx_ref, attn_ref, tm_ref,
                    conv1_w_ref, conv1_b_ref,
                    fc2_w_ref, fc2_b_ref,
                    conv2_w_ref, conv2_b_ref,
                    out_ref, *, tb, hw, c_in):
    ctx = ctx_ref[...]            # (C, TB*HW)  channel-major, batches packed on lanes
    attn = attn_ref[...]          # (TB, HW)

    # conv1 (1x1) for all TB batches at once: one wide MXU matmul, N = TB*HW.
    cm = jnp.maximum(
        jnp.dot(conv1_w_ref[...], ctx, preferred_element_type=jnp.float32)
        + conv1_b_ref[...], 0.0)                                     # (map_dim, TB*HW)

    # softmax over the flattened spatial axis, one row per batch.
    a = attn - jnp.max(attn, axis=1, keepdims=True)
    e = jnp.exp(a)
    p = e * pl.reciprocal(jnp.sum(e, axis=1, keepdims=True), approx=True)  # (TB, HW)

    fc2_w = fc2_w_ref[...]        # (map_dim, C)
    fc2_b = fc2_b_ref[...]        # (map_dim, 1)
    conv2_w = conv2_w_ref[...]    # (1, map_dim)
    conv2_b = conv2_b_ref[...]    # (1, 1)

    for b in range(tb):           # static unroll; per-batch work is tiny
        lo = b * hw
        ctx_b = ctx[:, lo:lo + hw]                                   # (C, HW), 128-aligned slice
        # attention-pooled context -> (C, 1)
        pooled = jnp.sum(ctx_b * p[b:b + 1, :], axis=1, keepdims=True)

        # fc2 as C broadcast-FMAs on the VPU (avoid a K=C, N=1 matvec on the MXU).
        z = fc2_b
        for c in range(c_in):
            z = z + fc2_w[:, c:c + 1] * pooled[c:c + 1, :]
        am = jax.nn.sigmoid(z)                                       # (map_dim, 1)

        # Fuse the text gate (precomputed) and attention gate into one scale.
        scale = tm_ref[:, b:b + 1] * am                              # (map_dim, 1)
        elt = cm[:, lo:lo + hw] * scale                              # (map_dim, HW)

        # Deferred L2 normalize: conv2 (linear) first, then divide the (1, HW) row.
        y = jnp.dot(conv2_w, elt, preferred_element_type=jnp.float32)  # (1, HW)
        nsq = jnp.sum(elt * elt, axis=0, keepdims=True)                # (1, HW)
        inv = pl.reciprocal(jnp.maximum(jnp.sqrt(nsq), 1e-12), approx=True)
        out_ref[b:b + 1, :] = jax.nn.sigmoid(y * inv + conv2_b)


def _pick_tb(batch, max_tb=8):
    """Batches per grid step: amortize step overhead, but keep >=2 grid steps
    (v7x has 2 TensorCores) when the batch allows it."""
    for tb in range(min(max_tb, batch), 0, -1):
        if batch % tb == 0 and (batch // tb >= 2 or batch == 1):
            return tb
    return 1


def relocate_forward(attention, context, text, params, tb=None):
    """attention: (B,1,H,W) f32, context: (B,C,H,W) f32, text: (B,text_dim) f32."""
    B, C, H, W = context.shape
    HW = H * W
    map_dim, _ = params["fc1_w"].shape
    if tb is None:
        tb = _pick_tb(B)
    G = B // tb

    # Hoisted fc1: one batched XLA matmul instead of B in-kernel N=1 matvecs.
    tm = jax.nn.relu(text @ params["fc1_w"].T + params["fc1_b"][:, 0])     # (B, map_dim)
    tm3 = tm.reshape(G, tb, map_dim).transpose(0, 2, 1)                    # (G, map_dim, TB)

    # Context channel-major with batch folded onto the lane axis: (C, B*HW).
    ctx2d = context.reshape(B, C, HW).transpose(1, 0, 2).reshape(C, B * HW)
    attn3 = attention.reshape(G, tb, HW)

    # VMEM budget (matters on v7x, 64 MiB): double-buffered inputs plus the
    # (map_dim, TB*HW) f32 intermediates must fit; at these toy sizes (<1 MiB)
    # the default scoped limit is ample, so no vmem_limit_bytes override.
    kernel = functools.partial(relocate_kernel, tb=tb, hw=HW, c_in=C)
    wmap = lambda i: (0, 0)

    out = pl.pallas_call(
        kernel,
        out_shape=jax.ShapeDtypeStruct((G, tb, HW), jnp.float32),
        grid_spec=pltpu.PrefetchScalarGridSpec(
            num_scalar_prefetch=0,
            grid=(G,),
            in_specs=[
                pl.BlockSpec((C, tb * HW), lambda i: (0, i)),        # context (C, TB*HW)
                pl.BlockSpec((None, tb, HW), lambda i: (i, 0, 0)),   # attention (TB, HW)
                pl.BlockSpec((None, map_dim, tb), lambda i: (i, 0, 0)),  # relu(fc1(text)).T
                pl.BlockSpec((map_dim, C), wmap),                    # conv1_w
                pl.BlockSpec((map_dim, 1), wmap),                    # conv1_b
                pl.BlockSpec((map_dim, C), wmap),                    # fc2_w
                pl.BlockSpec((map_dim, 1), wmap),                    # fc2_b
                pl.BlockSpec((1, map_dim), wmap),                    # conv2_w
                pl.BlockSpec((1, 1), wmap),                          # conv2_b
            ],
            out_specs=pl.BlockSpec((None, tb, HW), lambda i: (i, 0, 0)),
        ),
        compiler_params=pltpu.CompilerParams(dimension_semantics=("parallel",)),
    )(ctx2d, attn3, tm3,
      params["conv1_w"], params["conv1_b"],
      params["fc2_w"], params["fc2_b"],
      params["conv2_w"], params["conv2_b"])

    return out.reshape(B, 1, H, W)


def relocate_reference(attention, context, text, params):
    """Plain-JAX replica of the PyTorch forward (NCHW), for verification."""
    B, C, H, W = context.shape
    tm = jax.nn.relu(text @ params["fc1_w"].T + params["fc1_b"][:, 0])          # (B,M)
    cm = jax.nn.relu(jnp.einsum("mc,bchw->bmhw", params["conv1_w"], context)
                     + params["conv1_b"][:, 0][None, :, None, None])            # (B,M,H,W)
    p = jax.nn.softmax(attention.reshape(B, -1), axis=1).reshape(B, 1, H, W)
    pooled = jnp.sum(context * p, axis=(2, 3))                                  # (B,C)
    am = jax.nn.sigmoid(pooled @ params["fc2_w"].T + params["fc2_b"][:, 0])     # (B,M)
    elt = cm * tm[:, :, None, None] * am[:, :, None, None]
    norm = jnp.sqrt(jnp.sum(elt * elt, axis=1, keepdims=True))
    nrm = elt / jnp.maximum(norm, 1e-12)
    out = jax.nn.sigmoid(jnp.einsum("om,bmhw->bohw", params["conv2_w"], nrm)
                         + params["conv2_b"][0, 0])
    return out


def init_params(key, context_channels, map_dim=64, text_dim=256):
    ks = jax.random.split(key, 8)
    s = 0.05
    return {
        "fc1_w":  s * jax.random.normal(ks[0], (map_dim, text_dim), jnp.float32),
        "fc1_b":  s * jax.random.normal(ks[1], (map_dim, 1), jnp.float32),
        "fc2_w":  s * jax.random.normal(ks[2], (map_dim, context_channels), jnp.float32),
        "fc2_b":  s * jax.random.normal(ks[3], (map_dim, 1), jnp.float32),
        # conv weights are (out, in, 1, 1) in torch -> stored flattened (out, in)
        "conv1_w": s * jax.random.normal(ks[4], (map_dim, context_channels), jnp.float32),
        "conv1_b": s * jax.random.normal(ks[5], (map_dim, 1), jnp.float32),
        "conv2_w": s * jax.random.normal(ks[6], (1, map_dim), jnp.float32),
        "conv2_b": s * jax.random.normal(ks[7], (1, 1), jnp.float32),
    }


if __name__ == "__main__":
    B, C, H, W = 2, 4, 16, 16          # context_dim = (4, 16, 16)
    MAP_DIM, TEXT_DIM = 64, 256

    key = jax.random.PRNGKey(0)
    k_att, k_ctx, k_txt, k_par = jax.random.split(key, 4)

    attention = jax.random.normal(k_att, (B, 1, H, W), jnp.float32)
    context = jax.random.normal(k_ctx, (B, C, H, W), jnp.float32)
    text = jax.random.normal(k_txt, (B, TEXT_DIM), jnp.float32)
    params = init_params(k_par, C, MAP_DIM, TEXT_DIM)

    out = relocate_forward(attention, context, text, params)
    out = jax.block_until_ready(out)

    ref = relocate_reference(attention, context, text, params)
    assert out.shape == (B, 1, H, W)
    # Tolerance loosened slightly vs. 1e-5 because the kernel uses the EUP
    # approximate reciprocal for the softmax denominator and the L2 norm.
    assert jnp.allclose(out, ref, rtol=2e-3, atol=2e-3), "mismatch vs reference"

    print("KERNEL_OK")
</pallas_src>

<mosaic_0001>
module attributes {stable_mosaic.version = 11 : i64} {
  func.func @relocate_kernel(%arg0: i32, %arg1: memref<4x256xf32, #tpu.memory_space<vmem>>, %arg2: memref<1x1x256xf32, #tpu.memory_space<vmem>>, %arg3: memref<1x64x1xf32, #tpu.memory_space<vmem>>, %arg4: memref<64x4xf32, #tpu.memory_space<vmem>>, %arg5: memref<64x1xf32, #tpu.memory_space<vmem>>, %arg6: memref<64x4xf32, #tpu.memory_space<vmem>>, %arg7: memref<64x1xf32, #tpu.memory_space<vmem>>, %arg8: memref<1x64xf32, #tpu.memory_space<vmem>>, %arg9: memref<1x1xf32, #tpu.memory_space<vmem>>, %arg10: memref<1x1x256xf32, #tpu.memory_space<vmem>>) attributes {dimension_semantics = [#tpu.dimension_semantics<parallel>], iteration_bounds = array<i64: 2>, scalar_prefetch = 0 : i64, scratch_operands = 0 : i64, tpu.core_type = #tpu.core_type<tc>, window_params = [{transform_indices = @transform_0, window_bounds = array<i64: 4, 256>}, {transform_indices = @transform_1, window_bounds = array<i64: 1, 1, 256>}, {transform_indices = @transform_2, window_bounds = array<i64: 1, 64, 1>}, {pipeline_mode = #tpu.pipeline_mode<synchronous>, transform_indices = @transform_3, window_bounds = array<i64: 64, 4>}, {pipeline_mode = #tpu.pipeline_mode<synchronous>, transform_indices = @transform_4, window_bounds = array<i64: 64, 1>}, {pipeline_mode = #tpu.pipeline_mode<synchronous>, transform_indices = @transform_5, window_bounds = array<i64: 64, 4>}, {pipeline_mode = #tpu.pipeline_mode<synchronous>, transform_indices = @transform_6, window_bounds = array<i64: 64, 1>}, {pipeline_mode = #tpu.pipeline_mode<synchronous>, transform_indices = @transform_7, window_bounds = array<i64: 1, 64>}, {pipeline_mode = #tpu.pipeline_mode<synchronous>, transform_indices = @transform_8, window_bounds = array<i64: 1, 1>}, {transform_indices = @transform_9, window_bounds = array<i64: 1, 1, 256>}]} {
    %c0 = arith.constant 0 : index
    %c0_0 = arith.constant 0 : index
    %0 = vector.load %arg1[%c0, %c0_0] : memref<4x256xf32, #tpu.memory_space<vmem>>, vector<4x256xf32>
    %c0_1 = arith.constant 0 : index
    %c0_2 = arith.constant 0 : index
    %c0_3 = arith.constant 0 : index
    %1 = vector.load %arg2[%c0_1, %c0_2, %c0_3] : memref<1x1x256xf32, #tpu.memory_space<vmem>>, vector<1x1x256xf32>
    %2 = vector.shape_cast %1 : vector<1x1x256xf32> to vector<1x256xf32>
    %c0_4 = arith.constant 0 : index
    %c0_5 = arith.constant 0 : index
    %3 = vector.load %arg4[%c0_4, %c0_5] : memref<64x4xf32, #tpu.memory_space<vmem>>, vector<64x4xf32>
    %cst = arith.constant dense<0.000000e+00> : vector<64x256xf32>
    %4 = tpu.matmul %3, %0, %cst {dimension_numbers = #tpu.dot_dimension_numbers<[1], [0], [0], [1], [0, 0, 1, 1], [], []>} : vector<64x4xf32>, vector<4x256xf32>, vector<64x256xf32> -> vector<64x256xf32>
    %c0_6 = arith.constant 0 : index
    %c0_7 = arith.constant 0 : index
    %5 = vector.load %arg5[%c0_6, %c0_7] : memref<64x1xf32, #tpu.memory_space<vmem>>, vector<64x1xf32>
    %6 = vector.broadcast %5 : vector<64x1xf32> to vector<64x256xf32>
    %7 = arith.addf %4, %6 : vector<64x256xf32>
    %cst_8 = arith.constant 0.000000e+00 : f32
    %8 = vector.broadcast %cst_8 : f32 to vector<64x256xf32>
    %9 = arith.maximumf %7, %8 : vector<64x256xf32>
    %cst_9 = arith.constant dense<0xFF800000> : vector<1xf32>
    %10 = vector.multi_reduction <maximumf>, %2, %cst_9 [1] : vector<1x256xf32> to vector<1xf32>
    %11 = vector.shape_cast %10 : vector<1xf32> to vector<1x1xf32>
    %12 = vector.broadcast %11 : vector<1x1xf32> to vector<1x256xf32>
    %13 = arith.subf %2, %12 : vector<1x256xf32>
    %14 = math.exp %13 : vector<1x256xf32>
    %cst_10 = arith.constant dense<0.000000e+00> : vector<1xf32>
    %15 = vector.multi_reduction <add>, %14, %cst_10 [1] : vector<1x256xf32> to vector<1xf32>
    %16 = vector.shape_cast %15 : vector<1xf32> to vector<1x1xf32>
    %17 = tpu.reciprocal %16 {approx = true} : vector<1x1xf32> -> vector<1x1xf32>
    %18 = vector.broadcast %17 : vector<1x1xf32> to vector<1x256xf32>
    %19 = arith.mulf %14, %18 : vector<1x256xf32>
    %c0_11 = arith.constant 0 : index
    %c0_12 = arith.constant 0 : index
    %20 = vector.load %arg6[%c0_11, %c0_12] : memref<64x4xf32, #tpu.memory_space<vmem>>, vector<64x4xf32>
    %c0_13 = arith.constant 0 : index
    %c0_14 = arith.constant 0 : index
    %21 = vector.load %arg7[%c0_13, %c0_14] : memref<64x1xf32, #tpu.memory_space<vmem>>, vector<64x1xf32>
    %c0_15 = arith.constant 0 : index
    %c0_16 = arith.constant 0 : index
    %22 = vector.load %arg8[%c0_15, %c0_16] : memref<1x64xf32, #tpu.memory_space<vmem>>, vector<1x64xf32>
    %c0_17 = arith.constant 0 : index
    %c0_18 = arith.constant 0 : index
    %23 = vector.load %arg9[%c0_17, %c0_18] : memref<1x1xf32, #tpu.memory_space<vmem>>, vector<1x1xf32>
    %24 = vector.broadcast %19 : vector<1x256xf32> to vector<4x256xf32>
    %25 = arith.mulf %0, %24 : vector<4x256xf32>
    %cst_19 = arith.constant dense<0.000000e+00> : vector<4xf32>
    %26 = vector.multi_reduction <add>, %25, %cst_19 [1] : vector<4x256xf32> to vector<4xf32>
    %27 = vector.shape_cast %26 : vector<4xf32> to vector<4x1xf32>
    %28 = vector.extract_strided_slice %20 {offsets = [0, 0], sizes = [64, 1], strides = [1, 1]} : vector<64x4xf32> to vector<64x1xf32>
    %29 = vector.extract_strided_slice %27 {offsets = [0, 0], sizes = [1, 1], strides = [1, 1]} : vector<4x1xf32> to vector<1x1xf32>
    %30 = vector.broadcast %29 : vector<1x1xf32> to vector<64x1xf32>
    %31 = arith.mulf %28, %30 : vector<64x1xf32>
    %32 = arith.addf %21, %31 : vector<64x1xf32>
    %33 = vector.extract_strided_slice %20 {offsets = [0, 1], sizes = [64, 1], strides = [1, 1]} : vector<64x4xf32> to vector<64x1xf32>
    %34 = vector.extract_strided_slice %27 {offsets = [1, 0], sizes = [1, 1], strides = [1, 1]} : vector<4x1xf32> to vector<1x1xf32>
    %35 = vector.broadcast %34 : vector<1x1xf32> to vector<64x1xf32>
    %36 = arith.mulf %33, %35 : vector<64x1xf32>
    %37 = arith.addf %32, %36 : vector<64x1xf32>
    %38 = vector.extract_strided_slice %20 {offsets = [0, 2], sizes = [64, 1], strides = [1, 1]} : vector<64x4xf32> to vector<64x1xf32>
    %39 = vector.extract_strided_slice %27 {offsets = [2, 0], sizes = [1, 1], strides = [1, 1]} : vector<4x1xf32> to vector<1x1xf32>
    %40 = vector.broadcast %39 : vector<1x1xf32> to vector<64x1xf32>
    %41 = arith.mulf %38, %40 : vector<64x1xf32>
    %42 = arith.addf %37, %41 : vector<64x1xf32>
    %43 = vector.extract_strided_slice %20 {offsets = [0, 3], sizes = [64, 1], strides = [1, 1]} : vector<64x4xf32> to vector<64x1xf32>
    %44 = vector.extract_strided_slice %27 {offsets = [3, 0], sizes = [1, 1], strides = [1, 1]} : vector<4x1xf32> to vector<1x1xf32>
    %45 = vector.broadcast %44 : vector<1x1xf32> to vector<64x1xf32>
    %46 = arith.mulf %43, %45 : vector<64x1xf32>
    %47 = arith.addf %42, %46 : vector<64x1xf32>
    %48 = arith.negf %47 : vector<64x1xf32>
    %49 = math.exp %48 : vector<64x1xf32>
    %cst_20 = arith.constant 1.000000e+00 : f32
    %50 = vector.broadcast %cst_20 : f32 to vector<64x1xf32>
    %51 = arith.addf %50, %49 : vector<64x1xf32>
    %52 = arith.divf %50, %51 : vector<64x1xf32>
    %c0_21 = arith.constant 0 : index
    %c0_22 = arith.constant 0 : index
    %c0_23 = arith.constant 0 : index
    %53 = vector.load %arg3[%c0_21, %c0_22, %c0_23] : memref<1x64x1xf32, #tpu.memory_space<vmem>>, vector<1x64x1xf32>
    %54 = vector.shape_cast %53 : vector<1x64x1xf32> to vector<64x1xf32>
    %55 = arith.mulf %54, %52 : vector<64x1xf32>
    %56 = vector.broadcast %55 : vector<64x1xf32> to vector<64x256xf32>
    %57 = arith.mulf %9, %56 : vector<64x256xf32>
    %cst_24 = arith.constant dense<0.000000e+00> : vector<1x256xf32>
    %58 = tpu.matmul %22, %57, %cst_24 {dimension_numbers = #tpu.dot_dimension_numbers<[1], [0], [0], [1], [0, 0, 1, 1], [], []>} : vector<1x64xf32>, vector<64x256xf32>, vector<1x256xf32> -> vector<1x256xf32>
    %59 = arith.mulf %57, %57 : vector<64x256xf32>
    %cst_25 = arith.constant dense<0.000000e+00> : vector<256xf32>
    %60 = vector.multi_reduction <add>, %59, %cst_25 [0] : vector<64x256xf32> to vector<256xf32>
    %61 = vector.shape_cast %60 : vector<256xf32> to vector<1x256xf32>
    %62 = math.sqrt %61 : vector<1x256xf32>
    %cst_26 = arith.constant 9.99999996E-13 : f32
    %63 = vector.broadcast %cst_26 : f32 to vector<1x256xf32>
    %64 = arith.maximumf %62, %63 : vector<1x256xf32>
    %65 = tpu.reciprocal %64 {approx = true} : vector<1x256xf32> -> vector<1x256xf32>
    %66 = arith.mulf %58, %65 : vector<1x256xf32>
    %67 = vector.broadcast %23 : vector<1x1xf32> to vector<1x256xf32>
    %68 = arith.addf %66, %67 : vector<1x256xf32>
    %69 = arith.negf %68 : vector<1x256xf32>
    %70 = math.exp %69 : vector<1x256xf32>
    %cst_27 = arith.constant 1.000000e+00 : f32
    %71 = vector.broadcast %cst_27 : f32 to vector<1x256xf32>
    %72 = arith.addf %71, %70 : vector<1x256xf32>
    %73 = arith.divf %71, %72 : vector<1x256xf32>
    %c0_28 = arith.constant 0 : index
    %c0_29 = arith.constant 0 : index
    %c0_30 = arith.constant 0 : index
    %74 = vector.load %arg10[%c0_28, %c0_29, %c0_30] : memref<1x1x256xf32, #tpu.memory_space<vmem>>, vector<1x1x256xf32>
    %75 = vector.shape_cast %74 : vector<1x1x256xf32> to vector<1x256xf32>
    %76 = vector.shape_cast %73 : vector<1x256xf32> to vector<1x1x256xf32>
    tpu.vector_store %arg10[%c0_28, %c0_29, %c0_30], %76 {strides = array<i32>} : memref<1x1x256xf32, #tpu.memory_space<vmem>>, vector<1x1x256xf32>,
    return
  }
  func.func @transform_0(%arg0: i32) -> (i32, i32) {
    %c0_i32 = arith.constant 0 : i32
    %c0_i32_0 = arith.constant 0 : i32
    return %c0_i32, %arg0 : i32, i32
  }
  func.func @transform_1(%arg0: i32) -> (i32, i32, i32) {
    %c0_i32 = arith.constant 0 : i32
    %c0_i32_0 = arith.constant 0 : i32
    %c0_i32_1 = arith.constant 0 : i32
    return %arg0, %c0_i32, %c0_i32_0 : i32, i32, i32
  }
  func.func @transform_2(%arg0: i32) -> (i32, i32, i32) {
    %c0_i32 = arith.constant 0 : i32
    %c0_i32_0 = arith.constant 0 : i32
    %c0_i32_1 = arith.constant 0 : i32
    return %arg0, %c0_i32, %c0_i32_0 : i32, i32, i32
  }
  func.func @transform_3(%arg0: i32) -> (i32, i32) {
    %c0_i32 = arith.constant 0 : i32
    %c0_i32_0 = arith.constant 0 : i32
    %c0_i32_1 = arith.constant 0 : i32
    return %c0_i32, %c0_i32_0 : i32, i32
  }
  func.func @transform_4(%arg0: i32) -> (i32, i32) {
    %c0_i32 = arith.constant 0 : i32
    %c0_i32_0 = arith.constant 0 : i32
    %c0_i32_1 = arith.constant 0 : i32
    return %c0_i32, %c0_i32_0 : i32, i32
  }
  func.func @transform_5(%arg0: i32) -> (i32, i32) {
    %c0_i32 = arith.constant 0 : i32
    %c0_i32_0 = arith.constant 0 : i32
    %c0_i32_1 = arith.constant 0 : i32
    return %c0_i32, %c0_i32_0 : i32, i32
  }
  func.func @transform_6(%arg0: i32) -> (i32, i32) {
    %c0_i32 = arith.constant 0 : i32
    %c0_i32_0 = arith.constant 0 : i32
    %c0_i32_1 = arith.constant 0 : i32
    return %c0_i32, %c0_i32_0 : i32, i32
  }
  func.func @transform_7(%arg0: i32) -> (i32, i32) {
    %c0_i32 = arith.constant 0 : i32
    %c0_i32_0 = arith.constant 0 : i32
    %c0_i32_1 = arith.constant 0 : i32
    return %c0_i32, %c0_i32_0 : i32, i32
  }
  func.func @transform_8(%arg0: i32) -> (i32, i32) {
    %c0_i32 = arith.constant 0 : i32
    %c0_i32_0 = arith.constant 0 : i32
    %c0_i32_1 = arith.constant 0 : i32
    return %c0_i32, %c0_i32_0 : i32, i32
  }
  func.func @transform_9(%arg0: i32) -> (i32, i32, i32) {
    %c0_i32 = arith.constant 0 : i32
    %c0_i32_0 = arith.constant 0 : i32
    %c0_i32_1 = arith.constant 0 : i32
    return %arg0, %c0_i32, %c0_i32_0 : i32, i32, i32
  }
}

</mosaic_0001>

<llo_original>
// kernel: tpu_custom_call.1
$region0: #{tpu_custom_call.1}
  #allocation0 [shape = 'u32[]', space=smem, size = 0x4, offset = 0x4, fixed_abs, tag = 'smem constant byte address 0x4 - core index']
  #allocation1 [shape = 'u32[72,128]{1,0:T(1,128)}', space=vmem, size = 0x9000, scoped, tag = 'internal scratch']
  #allocation2 [shape = 'f32[1,1]{1,0:T(1,128)S(1)}', space=vmem, size = 0x200, scoped, tag = 'scoped memory for tpu_custom_call.1']
  %s0 = inlined_call_operand.vmem [shape: f32[4,512], index: 0, kind: input, shape index: {}]
  %s1 = inlined_call_operand.vmem [shape: f32[2,1,256], index: 1, kind: input, shape index: {}]
  %s2 = inlined_call_operand.vmem [shape: f32[2,64,1], index: 2, kind: input, shape index: {}]
  %s3 = inlined_call_operand.vmem [shape: f32[64,4], index: 3, kind: input, shape index: {}]
  %s4 = inlined_call_operand.vmem [shape: f32[64,1], index: 4, kind: input, shape index: {}]
  %s5 = inlined_call_operand.vmem [shape: f32[64,4], index: 5, kind: input, shape index: {}]
  %s6 = inlined_call_operand.vmem [shape: f32[64,1], index: 6, kind: input, shape index: {}]
  %s7 = inlined_call_operand.vmem [shape: f32[1,64], index: 7, kind: input, shape index: {}]
  %s8 = inlined_call_operand.<no memory space> [shape: f32[1,1], index: 8, kind: input, shape index: {}]
  %s9 = inlined_call_operand.hbm [shape: f32[2,1,256], index: 9, kind: output, shape index: {}]
  %s10 = sld [smem:[#allocation0]]
  $region69: #{tpu_custom_call.1} parent=0
    _
  %s12 = ssub.s32 1, %s10
  %s13 = scalar_select 0, %s12, %s10
  %v14 = vstv %s8
  %15 = vst [vmem:[#allocation2] sm:$0x1] %v14
  $region1: #{tpu_custom_call.1} parent=0
    #allocation3 [shape = 'u8[2048]{0}', space=vmem, size = 0x800, scoped, tag = 'output window, operand 0']
    #allocation4 [shape = 's32[2]{0}', space=sflag, size = 0x8, scoped, tag = 'scoped memory for tpu_custom_call.1']
    %16 = vsyncpa [#allocation4], 0
    %s17 = scalar_lea.sflag [#allocation4], 1
    %18 = vsyncpa %s17, 0
    loop: start=0, step=1, limit=4
    $region2: #{tpu_custom_call.1} parent=1 // loop_pre_header
      _
    $region3: #{tpu_custom_call.1} parent=1 // loop_header
      %s20 = sphi 0, %s24
      %p21 = scmp.ge.s32.totalorder %s20, 4
      %s30 = sphi 0, %s32
      %s33 = sphi 0, %s30
      %s34 = sphi 0, %s33
      %s50 = sphi 0, %s34
      %s56 = sphi 0, %s58
      %s59 = sphi 0, %s56
      %s60 = sphi 0, %s59
      %s76 = sphi 0, %s60
      %s82 = sphi 0, %s84
      %s85 = sphi 0, %s82
      %s86 = sphi 0, %s85
      %s102 = sphi 0, %s86
      %s106 = sphi 0, %s106
      %s108 = sphi 0, %s106
      %s109 = sphi 0, %s108
      %s123 = sphi 0, %s109
      %s127 = sphi 0, %s127
      %s129 = sphi 0, %s127
      %s130 = sphi 0, %s129
      %s144 = sphi 0, %s130
      %s148 = sphi 0, %s148
      %s150 = sphi 0, %s148
      %s151 = sphi 0, %s150
      %s165 = sphi 0, %s151
      %s169 = sphi 0, %s169
      %s171 = sphi 0, %s169
      %s172 = sphi 0, %s171
      %s186 = sphi 0, %s172
      %s190 = sphi 0, %s190
      %s192 = sphi 0, %s190
      %s193 = sphi 0, %s192
      %s207 = sphi 0, %s193
      %s211 = sphi 0, %s211
      %s213 = sphi 0, %s211
      %s214 = sphi 0, %s213
      %s228 = sphi 0, %s214
      %s234 = sphi 0, %s236
      %s237 = sphi 0, %s234
      %s238 = sphi 0, %s237
      %s254 = sphi 0, %s238
    $region4: #{tpu_custom_call.1} parent=1 // loop_header_branch
      %23 = sbr.rel (%p21) target = $region8
    $region5: #{tpu_custom_call.1} parent=1 // loop_body
      %s25 = ssub.s32 %s20, 1
      %s26 = ssub.s32 %s20, 2
      %s27 = sadd.s32 %s20, 1
      %s28 = ssub.s32 %s20, %s27
      %p29 = scmp.eq.s32.totalorder %s28, 0
      %s31 = sadd.s32 %s30, 1
      %s32 = scalar_select %p29, %s30, %s31
      %p35 = pneg %p29
      %p36 = scmp.eq.s32.totalorder %s20, 1
      %p37 = por %p35, %p36
      %p38 = scmp.ne.s32.totalorder %s30, %s33
      %p39 = scmp.eq.s32.totalorder %s20, 0
      %p40 = por %p38, %p39
      %p41 = scmp.ne.s32.totalorder %s30, %s33
      %p42 = scmp.eq.s32.totalorder %s25, 1
      %p43 = por %p41, %p42
      %p44 = scmp.ne.s32.totalorder %s33, %s34
      %p45 = scmp.eq.s32.totalorder %s25, 0
      %p46 = por %p44, %p45
      %p47 = scmp.ne.s32.totalorder %s33, %s34
      %p48 = scmp.eq.s32.totalorder %s26, 1
      %p49 = por %p47, %p48
      %p51 = scmp.ne.s32.totalorder %s34, %s50
      %p52 = scmp.eq.s32.totalorder %s26, 0
      %p53 = por %p51, %p52
      %s54 = ssub.s32 %s20, %s27
      %p55 = scmp.eq.s32.totalorder %s54, 0
      %s57 = sadd.s32 %s56, 1
      %s58 = scalar_select %p55, %s56, %s57
      %p61 = pneg %p55
      %p62 = scmp.eq.s32.totalorder %s20, 1
      %p63 = por %p61, %p62
      %p64 = scmp.ne.s32.totalorder %s56, %s59
      %p65 = scmp.eq.s32.totalorder %s20, 0
      %p66 = por %p64, %p65
      %p67 = scmp.ne.s32.totalorder %s56, %s59
      %p68 = scmp.eq.s32.totalorder %s25, 1
      %p69 = por %p67, %p68
      %p70 = scmp.ne.s32.totalorder %s59, %s60
      %p71 = scmp.eq.s32.totalorder %s25, 0
      %p72 = por %p70, %p71
      %p73 = scmp.ne.s32.totalorder %s59, %s60
      %p74 = scmp.eq.s32.totalorder %s26, 1
      %p75 = por %p73, %p74
      %p77 = scmp.ne.s32.totalorder %s60, %s76
      %p78 = scmp.eq.s32.totalorder %s26, 0
      %p79 = por %p77, %p78
      %s80 = ssub.s32 %s20, %s27
      %p81 = scmp.eq.s32.totalorder %s80, 0
      %s83 = sadd.s32 %s82, 1
      %s84 = scalar_select %p81, %s82, %s83
      %p87 = pneg %p81
      %p88 = scmp.eq.s32.totalorder %s20, 1
      %p89 = por %p87, %p88
      %p90 = scmp.ne.s32.totalorder %s82, %s85
      %p91 = scmp.eq.s32.totalorder %s20, 0
      %p92 = por %p90, %p91
      %p93 = scmp.ne.s32.totalorder %s82, %s85
      %p94 = scmp.eq.s32.totalorder %s25, 1
      %p95 = por %p93, %p94
      %p96 = scmp.ne.s32.totalorder %s85, %s86
      %p97 = scmp.eq.s32.totalorder %s25, 0
      %p98 = por %p96, %p97
      %p99 = scmp.ne.s32.totalorder %s85, %s86
      %p100 = scmp.eq.s32.totalorder %s26, 1
      %p101 = por %p99, %p100
      %p103 = scmp.ne.s32.totalorder %s86, %s102
      %p104 = scmp.eq.s32.totalorder %s26, 0
      %p105 = por %p103, %p104
      %s107 = sadd.s32 %s106, 1
      %p110 = scmp.eq.s32.totalorder %s20, 1
      %p111 = scmp.ne.s32.totalorder %s106, %s108
      %p112 = scmp.eq.s32.totalorder %s20, 0
      %p113 = por %p111, %p112
      %p114 = scmp.ne.s32.totalorder %s106, %s108
      %p115 = scmp.eq.s32.totalorder %s25, 1
      %p116 = por %p114, %p115
      %p117 = scmp.ne.s32.totalorder %s108, %s109
      %p118 = scmp.eq.s32.totalorder %s25, 0
      %p119 = por %p117, %p118
      %p120 = scmp.ne.s32.totalorder %s108, %s109
      %p121 = scmp.eq.s32.totalorder %s26, 1
      %p122 = por %p120, %p121
      %p124 = scmp.ne.s32.totalorder %s109, %s123
      %p125 = scmp.eq.s32.totalorder %s26, 0
      %p126 = por %p124, %p125
      %s128 = sadd.s32 %s127, 1
      %p131 = scmp.eq.s32.totalorder %s20, 1
      %p132 = scmp.ne.s32.totalorder %s127, %s129
      %p133 = scmp.eq.s32.totalorder %s20, 0
      %p134 = por %p132, %p133
      %p135 = scmp.ne.s32.totalorder %s127, %s129
      %p136 = scmp.eq.s32.totalorder %s25, 1
      %p137 = por %p135, %p136
      %p138 = scmp.ne.s32.totalorder %s129, %s130
      %p139 = scmp.eq.s32.totalorder %s25, 0
      %p140 = por %p138, %p139
      %p141 = scmp.ne.s32.totalorder %s129, %s130
      %p142 = scmp.eq.s32.totalorder %s26, 1
      %p143 = por %p141, %p142
      %p145 = scmp.ne.s32.totalorder %s130, %s144
      %p146 = scmp.eq.s32.totalorder %s26, 0
      %p147 = por %p145, %p146
      %s149 = sadd.s32 %s148, 1
      %p152 = scmp.eq.s32.totalorder %s20, 1
      %p153 = scmp.ne.s32.totalorder %s148, %s150
      %p154 = scmp.eq.s32.totalorder %s20, 0
      %p155 = por %p153, %p154
      %p156 = scmp.ne.s32.totalorder %s148, %s150
      %p157 = scmp.eq.s32.totalorder %s25, 1
      %p158 = por %p156, %p157
      %p159 = scmp.ne.s32.totalorder %s150, %s151
      %p160 = scmp.eq.s32.totalorder %s25, 0
      %p161 = por %p159, %p160
      %p162 = scmp.ne.s32.totalorder %s150, %s151
      %p163 = scmp.eq.s32.totalorder %s26, 1
      %p164 = por %p162, %p163
      %p166 = scmp.ne.s32.totalorder %s151, %s165
      %p167 = scmp.eq.s32.totalorder %s26, 0
      %p168 = por %p166, %p167
      %s170 = sadd.s32 %s169, 1
      %p173 = scmp.eq.s32.totalorder %s20, 1
      %p174 = scmp.ne.s32.totalorder %s169, %s171
      %p175 = scmp.eq.s32.totalorder %s20, 0
      %p176 = por %p174, %p175
      %p177 = scmp.ne.s32.totalorder %s169, %s171
      %p178 = scmp.eq.s32.totalorder %s25, 1
      %p179 = por %p177, %p178
      %p180 = scmp.ne.s32.totalorder %s171, %s172
      %p181 = scmp.eq.s32.totalorder %s25, 0
      %p182 = por %p180, %p181
      %p183 = scmp.ne.s32.totalorder %s171, %s172
      %p184 = scmp.eq.s32.totalorder %s26, 1
      %p185 = por %p183, %p184
      %p187 = scmp.ne.s32.totalorder %s172, %s186
      %p188 = scmp.eq.s32.totalorder %s26, 0
      %p189 = por %p187, %p188
      %s191 = sadd.s32 %s190, 1
      %p194 = scmp.eq.s32.totalorder %s20, 1
      %p195 = scmp.ne.s32.totalorder %s190, %s192
      %p196 = scmp.eq.s32.totalorder %s20, 0
      %p197 = por %p195, %p196
      %p198 = scmp.ne.s32.totalorder %s190, %s192
      %p199 = scmp.eq.s32.totalorder %s25, 1
      %p200 = por %p198, %p199
      %p201 = scmp.ne.s32.totalorder %s192, %s193
      %p202 = scmp.eq.s32.totalorder %s25, 0
      %p203 = por %p201, %p202
      %p204 = scmp.ne.s32.totalorder %s192, %s193
      %p205 = scmp.eq.s32.totalorder %s26, 1
      %p206 = por %p204, %p205
      %p208 = scmp.ne.s32.totalorder %s193, %s207
      %p209 = scmp.eq.s32.totalorder %s26, 0
      %p210 = por %p208, %p209
      %s212 = sadd.s32 %s211, 1
      %p215 = scmp.eq.s32.totalorder %s20, 1
      %p216 = scmp.ne.s32.totalorder %s211, %s213
      %p217 = scmp.eq.s32.totalorder %s20, 0
      %p218 = por %p216, %p217
      %p219 = scmp.ne.s32.totalorder %s211, %s213
      %p220 = scmp.eq.s32.totalorder %s25, 1
      %p221 = por %p219, %p220
      %p222 = scmp.ne.s32.totalorder %s213, %s214
      %p223 = scmp.eq.s32.totalorder %s25, 0
      %p224 = por %p222, %p223
      %p225 = scmp.ne.s32.totalorder %s213, %s214
      %p226 = scmp.eq.s32.totalorder %s26, 1
      %p227 = por %p225, %p226
      %p229 = scmp.ne.s32.totalorder %s214, %s228
      %p230 = scmp.eq.s32.totalorder %s26, 0
      %p231 = por %p229, %p230
      %s232 = ssub.s32 %s20, %s27
      %p233 = scmp.eq.s32.totalorder %s232, 0
      %s235 = sadd.s32 %s234, 1
      %s236 = scalar_select %p233, %s234, %s235
      %p239 = pneg %p233
      %p240 = scmp.eq.s32.totalorder %s20, 1
      %p241 = por %p239, %p240
      %p242 = scmp.ne.s32.totalorder %s234, %s237
      %p243 = scmp.eq.s32.totalorder %s20, 0
      %p244 = por %p242, %p243
      %p245 = scmp.ne.s32.totalorder %s234, %s237
      %p246 = scmp.eq.s32.totalorder %s25, 1
      %p247 = por %p245, %p246
      %p248 = scmp.ne.s32.totalorder %s237, %s238
      %p249 = scmp.eq.s32.totalorder %s25, 0
      %p250 = por %p248, %p249
      %p251 = scmp.ne.s32.totalorder %s237, %s238
      %p252 = scmp.eq.s32.totalorder %s26, 1
      %p253 = por %p251, %p252
      %p255 = scmp.ne.s32.totalorder %s238, %s254
      %p256 = scmp.eq.s32.totalorder %s26, 0
      %p257 = por %p255, %p256
      %p258 = scmp.le.s32.totalorder 1, %s20
      %p259 = scmp.lt.s32.totalorder %s20, 3
      %p260 = pnand %p258, %p259
      %p261 = pneg %p260
      // Predicated region
      $region9: #{tpu_custom_call.1} parent=5 // pred_check
        _
      $region10: #{tpu_custom_call.1} parent=5 // pred_check_branch
        %263 = sbr.rel (%p260) target = $region12
      $region11: #{tpu_custom_call.1} parent=5 // pred_region
        %s264 = ssub.s32 %s20, 1
        // Predicated region
        $region13: #{tpu_custom_call.1} parent=11 // pred_check
          %p265 = pneg %p119
        $region14: #{tpu_custom_call.1} parent=11 // pred_check_branch
          %267 = sbr.rel (%p265) target = $region16
        $region15: #{tpu_custom_call.1} parent=11 // pred_region
          _
        $region16: #{tpu_custom_call.1} parent=11 // pred_fallthru
          _
        // Predicated region
        $region17: #{tpu_custom_call.1} parent=11 // pred_check
          %p268 = pneg %p140
        $region18: #{tpu_custom_call.1} parent=11 // pred_check_branch
          %270 = sbr.rel (%p268) target = $region20
        $region19: #{tpu_custom_call.1} parent=11 // pred_region
          _
        $region20: #{tpu_custom_call.1} parent=11 // pred_fallthru
          _
        // Predicated region
        $region21: #{tpu_custom_call.1} parent=11 // pred_check
          %p271 = pneg %p161
        $region22: #{tpu_custom_call.1} parent=11 // pred_check_branch
          %273 = sbr.rel (%p271) target = $region24
        $region23: #{tpu_custom_call.1} parent=11 // pred_region
          _
        $region24: #{tpu_custom_call.1} parent=11 // pred_fallthru
          _
        // Predicated region
        $region25: #{tpu_custom_call.1} parent=11 // pred_check
          %p274 = pneg %p182
        $region26: #{tpu_custom_call.1} parent=11 // pred_check_branch
          %276 = sbr.rel (%p274) target = $region28
        $region27: #{tpu_custom_call.1} parent=11 // pred_region
          _
        $region28: #{tpu_custom_call.1} parent=11 // pred_fallthru
          _
        // Predicated region
        $region29: #{tpu_custom_call.1} parent=11 // pred_check
          %p277 = pneg %p203
        $region30: #{tpu_custom_call.1} parent=11 // pred_check_branch
          %279 = sbr.rel (%p277) target = $region32
        $region31: #{tpu_custom_call.1} parent=11 // pred_region
          _
        $region32: #{tpu_custom_call.1} parent=11 // pred_fallthru
          _
        // Predicated region
        $region33: #{tpu_custom_call.1} parent=11 // pred_check
          %p280 = pneg %p224
        $region34: #{tpu_custom_call.1} parent=11 // pred_check_branch
          %282 = sbr.rel (%p280) target = $region36
        $region35: #{tpu_custom_call.1} parent=11 // pred_region
          _
        $region36: #{tpu_custom_call.1} parent=11 // pred_fallthru
          _
      $region12: #{tpu_custom_call.1} parent=5 // pred_fallthru
        _
      %p283 = scmp.lt.s32.totalorder %s20, 2
      // Predicated region
      $region37: #{tpu_custom_call.1} parent=5 // pred_check
        %p284 = pneg %p283
      $region38: #{tpu_custom_call.1} parent=5 // pred_check_branch
        %286 = sbr.rel (%p284) target = $region40
      $region39: #{tpu_custom_call.1} parent=5 // pred_region
        // Predicated region
        $region41: #{tpu_custom_call.1} parent=39 // pred_check
          %p287 = pneg %p40
        $region42: #{tpu_custom_call.1} parent=39 // pred_check_branch
          %289 = sbr.rel (%p287) target = $region44
        $region43: #{tpu_custom_call.1} parent=39 // pred_region
          %s290 = smul.u32 2, %s20
          %p291 = scmp.lt.s32.totalorder %s290, 3
          %s292 = scalar_select %p291, %s290, 3
          %s293 = smul.addr %s292, 4
          %s294 = scalar_lea.vmem %s0, %s293
          %s295 = smul.u32 2, %s20
        $region44: #{tpu_custom_call.1} parent=39 // pred_fallthru
          _
        // Predicated region
        $region45: #{tpu_custom_call.1} parent=39 // pred_check
          %p296 = pneg %p66
        $region46: #{tpu_custom_call.1} parent=39 // pred_check_branch
          %298 = sbr.rel (%p296) target = $region48
        $region47: #{tpu_custom_call.1} parent=39 // pred_region
          %p299 = scmp.lt.s32.totalorder %s20, 1
          %s300 = scalar_select %p299, %s20, 1
          %s301 = smul.addr %s300, 2
          %s302 = scalar_lea.vmem %s1, %s301
        $region48: #{tpu_custom_call.1} parent=39 // pred_fallthru
          _
        // Predicated region
        $region49: #{tpu_custom_call.1} parent=39 // pred_check
          %p303 = pneg %p92
        $region50: #{tpu_custom_call.1} parent=39 // pred_check_branch
          %305 = sbr.rel (%p303) target = $region52
        $region51: #{tpu_custom_call.1} parent=39 // pred_region
          %p306 = scmp.lt.s32.totalorder %s20, 1
          %s307 = scalar_select %p306, %s20, 1
          %s308 = smul.addr %s307, 8
          %s309 = smul.addr %s308, 8
          %s310 = scalar_lea.vmem %s2, %s309
        $region52: #{tpu_custom_call.1} parent=39 // pred_fallthru
          _
      $region40: #{tpu_custom_call.1} parent=5 // pred_fallthru
        _
      %p311 = scmp.le.s32.totalorder 1, %s20
      %p312 = scmp.lt.s32.totalorder %s20, 3
      %p313 = pnand %p311, %p312
      %p314 = pneg %p313
      // Predicated region
      $region53: #{tpu_custom_call.1} parent=5 // pred_check
        _
      $region54: #{tpu_custom_call.1} parent=5 // pred_check_branch
        %316 = sbr.rel (%p313) target = $region56
      $region55: #{tpu_custom_call.1} parent=5 // pred_region
        %s317 = ssub.s32 %s20, 1
        %s318 = smul.u32 2, %s25
        %p319 = scmp.lt.s32.totalorder %s318, 3
        %s320 = scalar_select %p319, %s318, 3
        %s321 = smul.addr %s320, 4
        %s322 = scalar_lea.vmem %s0, %s321
        %p323 = pneg %p46
        %p324 = pneg %p43
        %p325 = scmp.lt.s32.totalorder %s25, 1
        %s326 = scalar_select %p325, %s25, 1
        %s327 = smul.addr %s326, 2
        %s328 = scalar_lea.vmem %s1, %s327
        %p329 = pneg %p72
        %p330 = pneg %p69
        %p331 = scmp.lt.s32.totalorder %s25, 1
        %s332 = scalar_select %p331, %s25, 1
        %s333 = smul.addr %s332, 8
        %s334 = smul.addr %s333, 8
        %s335 = scalar_lea.vmem %s2, %s334
        %p336 = pneg %p98
        %p337 = pneg %p95
        %p338 = pneg %p119
        %p339 = pneg %p116
        %p340 = pneg %p140
        %p341 = pneg %p137
        %p342 = pneg %p161
        %p343 = pneg %p158
        %p344 = pneg %p182
        %p345 = pneg %p179
        %p346 = pneg %p203
        %p347 = pneg %p200
        %p348 = pneg %p224
        %p349 = pneg %p221
        %p350 = pneg %p250
        %p351 = pneg %p247
        %s352 = sand.u32 %s237, 1
        %s353 = scalar_lea.sflag [#allocation4], %s352
        %s354 = sand.u32 %s237, 1
        %s355 = smul.addr %s354, 2
        %s356 = scalar_lea.vmem [#allocation3], %s355
        %s357 = smul.u32 2, %s25
        %p358 = scmp.lt.s32.totalorder %s357, 3
        %s359 = scalar_select %p358, %s357, 3
        %s360 = smul.addr %s359, 4
        %s361 = scalar_lea.vmem %s0, %s360
        %s362 = smul.u32 2, %s25
        %p363 = scmp.lt.s32.totalorder %s25, 1
        %s364 = scalar_select %p363, %s25, 1
        %s365 = smul.addr %s364, 2
        %s366 = scalar_lea.vmem %s1, %s365
        %p367 = scmp.lt.s32.totalorder %s25, 1
        %s368 = scalar_select %p367, %s25, 1
        %s369 = smul.addr %s368, 8
        %s370 = smul.addr %s369, 8
        %s371 = scalar_lea.vmem %s2, %s370
        %v372 = vld [vmem:[%s361] sm:$0xff]
        %v373 = vld [vmem:[%s366] sm:$0x3]
        %v374 = vld [vmem:[%s3] sm:$0xff]
        %v375 = vld [vmem:[%s3 + $0x8] sm:$0xff]
        %v376 = vld [vmem:[%s3 + $0x10] sm:$0xff]
        %v377 = vld [vmem:[%s3 + $0x18] sm:$0xff]
        %v378 = vld [vmem:[%s3 + $0x20] sm:$0xff]
        %v379 = vld [vmem:[%s3 + $0x28] sm:$0xff]
        %v380 = vld [vmem:[%s3 + $0x30] sm:$0xff]
        %v381 = vld [vmem:[%s3 + $0x38] sm:$0xff]
        %v382 = vld [vmem:[%s4] sm:$0xff]
        %v383 = vld [vmem:[%s4 + $0x8] sm:$0xff]
        %v384 = vld [vmem:[%s4 + $0x10] sm:$0xff]
        %v385 = vld [vmem:[%s4 + $0x18] sm:$0xff]
        %v386 = vld [vmem:[%s4 + $0x20] sm:$0xff]
        %v387 = vld [vmem:[%s4 + $0x28] sm:$0xff]
        %v388 = vld [vmem:[%s4 + $0x30] sm:$0xff]
        %v389 = vld [vmem:[%s4 + $0x38] sm:$0xff]
        %391 = vset.pattern.permute.xlu0 0
        %392 = vperm.xlu0 %391, %v382
        %v393 = vpop.permute.xlu0 %392
        %396 = vset.pattern.permute.xlu0 0
        %397 = vperm.xlu0 %396, %v383
        %v398 = vpop.permute.xlu0 %397
        %401 = vset.pattern.permute.xlu0 0
        %402 = vperm.xlu0 %401, %v384
        %v403 = vpop.permute.xlu0 %402
        %406 = vset.pattern.permute.xlu0 0
        %407 = vperm.xlu0 %406, %v385
        %v408 = vpop.permute.xlu0 %407
        %411 = vset.pattern.permute.xlu0 0
        %412 = vperm.xlu0 %411, %v386
        %v413 = vpop.permute.xlu0 %412
        %416 = vset.pattern.permute.xlu0 0
        %417 = vperm.xlu0 %416, %v387
        %v418 = vpop.permute.xlu0 %417
        %421 = vset.pattern.permute.xlu0 0
        %422 = vperm.xlu0 %421, %v388
        %v423 = vpop.permute.xlu0 %422
        %426 = vset.pattern.permute.xlu0 0
        %427 = vperm.xlu0 %426, %v389
        %v428 = vpop.permute.xlu0 %427
        %431 = vst [vmem:[#allocation1] ss:$2 sm:$0xff] %v372
        %v432 = vld.sshfl [vmem:[#allocation1] sm:$0xff pattern:$0x75316420]
        %v433 = vld.sshfl [vmem:[#allocation1 + $0x8] sm:$0xff pattern:$0x75316420]
        %vm434 = vcmask 31744
        %v436 = vsel %vm434, %v374, 0
        %v439 = vsel %vm434, %v375, 0
        %v442 = vsel %vm434, %v376, 0
        %v445 = vsel %vm434, %v377, 0
        %v448 = vsel %vm434, %v378, 0
        %v451 = vsel %vm434, %v379, 0
        %v454 = vsel %vm434, %v380, 0
        %v457 = vsel %vm434, %v381, 0
        %vm459 = vcmask 1043456
        %v460 = vsel %vm459, %v432, 0
        %v462 = vsel %vm459, %v433, 0
        %464 = vmatpush.msra.mxu0 0.0
        %465 = vmatpush.msra.mxu0 0.0
        %466 = vmatpush.msra.mxu0 0.0
        %467 = vmatpush.msra.mxu0 0.0
        %468 = vmatpush.msra.mxu0 0.0
        %469 = vmatpush.msra.mxu0 0.0
        %470 = vmatpush.msra.mxu0 0.0
        %471 = vmatpush.msra.mxu0 0.0
        %472 = vmatpush.msra.mxu0 0.0
        %473 = vmatpush.msra.mxu0 0.0
        %474 = vmatpush.msra.mxu0 0.0
        %475 = vmatpush.msra.mxu0 0.0
        %476 = vmatpush.msra.mxu0 0.0
        %477 = vmatpush.msra.mxu0 0.0
        %478 = vmatpush.msra.mxu0 0.0
        %479 = vmatpush.msra.mxu0 %v460
        %480 = vmatmul.f32.gmra.mxu0 %v436
        %v481 = vpop.f32.mrf.mxu0
        %v482 = vadd.f32 %v393, %v481
        %483 = vmatmul.f32.gmra.mxu0 %v439
        %v484 = vpop.f32.mrf.mxu0
        %v485 = vadd.f32 %v398, %v484
        %486 = vmatmul.f32.gmra.mxu0 %v442
        %v487 = vpop.f32.mrf.mxu0
        %v488 = vadd.f32 %v403, %v487
        %489 = vmatmul.f32.gmra.mxu0 %v445
        %v490 = vpop.f32.mrf.mxu0
        %v491 = vadd.f32 %v408, %v490
        %492 = vmatmul.f32.gmra.mxu0 %v448
        %v493 = vpop.f32.mrf.mxu0
        %v494 = vadd.f32 %v413, %v493
        %495 = vmatmul.f32.gmra.mxu0 %v451
        %v496 = vpop.f32.mrf.mxu0
        %v497 = vadd.f32 %v418, %v496
        %498 = vmatmul.f32.gmra.mxu0 %v454
        %v499 = vpop.f32.mrf.mxu0
        %v500 = vadd.f32 %v423, %v499
        %501 = vmatmul.f32.gmra.mxu0 %v457
        %v502 = vpop.f32.mrf.mxu0
        %v503 = vadd.f32 %v428, %v502
        %504 = vdwg.mxu0
        %505 = vmatpush.msra.mxu0 0.0
        %506 = vmatpush.msra.mxu0 0.0
        %507 = vmatpush.msra.mxu0 0.0
        %508 = vmatpush.msra.mxu0 0.0
        %509 = vmatpush.msra.mxu0 0.0
        %510 = vmatpush.msra.mxu0 0.0
        %511 = vmatpush.msra.mxu0 0.0
        %512 = vmatpush.msra.mxu0 0.0
        %513 = vmatpush.msra.mxu0 0.0
        %514 = vmatpush.msra.mxu0 0.0
        %515 = vmatpush.msra.mxu0 0.0
        %516 = vmatpush.msra.mxu0 0.0
        %517 = vmatpush.msra.mxu0 0.0
        %518 = vmatpush.msra.mxu0 0.0
        %519 = vmatpush.msra.mxu0 0.0
        %520 = vmatpush.msra.mxu0 %v462
        %521 = vmatmul.f32.gmra.mxu0 %v436
        %v522 = vpop.f32.mrf.mxu0
        %v523 = vadd.f32 %v393, %v522
        %524 = vmatmul.f32.gmra.mxu0 %v439
        %v525 = vpop.f32.mrf.mxu0
        %v526 = vadd.f32 %v398, %v525
        %527 = vmatmul.f32.gmra.mxu0 %v442
        %v528 = vpop.f32.mrf.mxu0
        %v529 = vadd.f32 %v403, %v528
        %530 = vmatmul.f32.gmra.mxu0 %v445
        %v531 = vpop.f32.mrf.mxu0
        %v532 = vadd.f32 %v408, %v531
        %533 = vmatmul.f32.gmra.mxu0 %v448
        %v534 = vpop.f32.mrf.mxu0
        %v535 = vadd.f32 %v413, %v534
        %536 = vmatmul.f32.gmra.mxu0 %v451
        %v537 = vpop.f32.mrf.mxu0
        %v538 = vadd.f32 %v418, %v537
        %539 = vmatmul.f32.gmra.mxu0 %v454
        %v540 = vpop.f32.mrf.mxu0
        %v541 = vadd.f32 %v423, %v540
        %542 = vmatmul.f32.gmra.mxu0 %v457
        %v543 = vpop.f32.mrf.mxu0
        %v544 = vadd.f32 %v428, %v543
        %545 = vdwg.mxu0
        %v546 = vmax.f32 %v482, 0.0
        %v547 = vmax.f32 %v523, 0.0
        %v548 = vmax.f32 %v485, 0.0
        %v549 = vmax.f32 %v526, 0.0
        %v550 = vmax.f32 %v488, 0.0
        %v551 = vmax.f32 %v529, 0.0
        %v552 = vmax.f32 %v491, 0.0
        %v553 = vmax.f32 %v532, 0.0
        %v554 = vmax.f32 %v494, 0.0
        %v555 = vmax.f32 %v535, 0.0
        %v556 = vmax.f32 %v497, 0.0
        %v557 = vmax.f32 %v538, 0.0
        %v558 = vmax.f32 %v500, 0.0
        %v559 = vmax.f32 %v541, 0.0
        %v560 = vmax.f32 %v503, 0.0
        %v561 = vmax.f32 %v544, 0.0
        %v563 = vperm.slane %v373, 0
        %v564 = vperm.slane %v373, 1
        %vm567 = vcmask 1040384
        %v568 = vsel %vm567, %v563, -inf
        %v569 = vsel %vm567, %v564, -inf
        %v570 = vmax.f32 %v568, %v569
        %571 = vmax.xlane.f32.xlu0 %v570
        %v572 = vpop.xlane.xlu0 %571
        %v574 = vperm.slane %v572, 0
        %v576 = vsub.f32 %v373, %v574
        %v577 = vmul.f32 %v576, 1.442695
        %v578 = vpow.pop %v577
        %v580 = vperm.slane %v578, 0
        %v581 = vperm.slane %v578, 1
        %v584 = vsel %vm567, %v580, 0.0
        %v585 = vsel %vm567, %v581, 0.0
        %v586 = vadd.f32 %v584, %v585
        %587 = vadd.xlane.f32.xlu0 %v586
        %v588 = vpop.xlane.xlu0 %587
        %v589 = vrcp.pop %v588
        %v591 = vperm.slane %v589, 0
        %v593 = vmul.f32 %v578, %v591
        %v594 = vld [vmem:[%s5] sm:$0xff]
        %v595 = vld [vmem:[%s5 + $0x8] sm:$0xff]
        %v596 = vld [vmem:[%s5 + $0x10] sm:$0xff]
        %v597 = vld [vmem:[%s5 + $0x18] sm:$0xff]
        %v598 = vld [vmem:[%s5 + $0x20] sm:$0xff]
        %v599 = vld [vmem:[%s5 + $0x28] sm:$0xff]
        %v600 = vld [vmem:[%s5 + $0x30] sm:$0xff]
        %v601 = vld [vmem:[%s5 + $0x38] sm:$0xff]
        %v602 = vld [vmem:[%s6] sm:$0xff]
        %v603 = vld [vmem:[%s6 + $0x8] sm:$0xff]
        %v604 = vld [vmem:[%s6 + $0x10] sm:$0xff]
        %v605 = vld [vmem:[%s6 + $0x18] sm:$0xff]
        %v606 = vld [vmem:[%s6 + $0x20] sm:$0xff]
        %v607 = vld [vmem:[%s6 + $0x28] sm:$0xff]
        %v608 = vld [vmem:[%s6 + $0x30] sm:$0xff]
        %v609 = vld [vmem:[%s6 + $0x38] sm:$0xff]
        %v610 = vld [vmem:[%s7] sm:$0x1]
        %v611 = vld [vmem:[#allocation2] sm:$0x1]
        %v613 = vperm.slane %v593, 0
        %v614 = vperm.slane %v593, 1
        %v615 = vrot.slane %v614, 4
        %v616 = vsel %vm459, %v613, %v615
        %v618 = vmul.f32 %v372, %v616
        %620 = vst [vmem:[#allocation1] ss:$2 sm:$0xff] %v618
        %v621 = vld.sshfl [vmem:[#allocation1] sm:$0xff pattern:$0x75316420]
        %v622 = vld.sshfl [vmem:[#allocation1 + $0x8] sm:$0xff pattern:$0x75316420]
        %v625 = vsel %vm459, %v621, 0.0
        %v626 = vsel %vm459, %v622, 0.0
        %v627 = vadd.f32 %v625, %v626
        %628 = vadd.xlane.f32.xlu0 %v627
        %v629 = vpop.xlane.xlu0 %628
        %v630 = vperm.slane %v629, 0
        %v631 = vmul.f32 %v594, %v630
        %v632 = vmul.f32 %v595, %v630
        %v633 = vmul.f32 %v596, %v630
        %v634 = vmul.f32 %v597, %v630
        %v635 = vmul.f32 %v598, %v630
        %v636 = vmul.f32 %v599, %v630
        %v637 = vmul.f32 %v600, %v630
        %v638 = vmul.f32 %v601, %v630
        %v639 = vadd.f32 %v602, %v631
        %v640 = vadd.f32 %v603, %v632
        %v641 = vadd.f32 %v604, %v633
        %v642 = vadd.f32 %v605, %v634
        %v643 = vadd.f32 %v606, %v635
        %v644 = vadd.f32 %v607, %v636
        %v645 = vadd.f32 %v608, %v637
        %v646 = vadd.f32 %v609, %v638
        %v647 = vperm.slane %v629, 1
        %v648 = vmul.f32 %v594, %v647
        %v649 = vmul.f32 %v595, %v647
        %v650 = vmul.f32 %v596, %v647
        %v651 = vmul.f32 %v597, %v647
        %v652 = vmul.f32 %v598, %v647
        %v653 = vmul.f32 %v599, %v647
        %v654 = vmul.f32 %v600, %v647
        %v655 = vmul.f32 %v601, %v647
        %664 = vrot.lane.b32.xlu0 %v648, 127
        %v665 = vpop.permute.xlu0 %664
        %666 = vrot.lane.b32.xlu0 %v649, 127
        %v667 = vpop.permute.xlu0 %666
        %668 = vrot.lane.b32.xlu0 %v650, 127
        %v669 = vpop.permute.xlu0 %668
        %670 = vrot.lane.b32.xlu0 %v651, 127
        %v671 = vpop.permute.xlu0 %670
        %672 = vrot.lane.b32.xlu0 %v652, 127
        %v673 = vpop.permute.xlu0 %672
        %674 = vrot.lane.b32.xlu0 %v653, 127
        %v675 = vpop.permute.xlu0 %674
        %676 = vrot.lane.b32.xlu0 %v654, 127
        %v677 = vpop.permute.xlu0 %676
        %678 = vrot.lane.b32.xlu0 %v655, 127
        %v679 = vpop.permute.xlu0 %678
        %v688 = vadd.f32 %v639, %v665
        %v689 = vadd.f32 %v640, %v667
        %v690 = vadd.f32 %v641, %v669
        %v691 = vadd.f32 %v642, %v671
        %v692 = vadd.f32 %v643, %v673
        %v693 = vadd.f32 %v644, %v675
        %v694 = vadd.f32 %v645, %v677
        %v695 = vadd.f32 %v646, %v679
        %v696 = vperm.slane %v629, 2
        %v697 = vmul.f32 %v594, %v696
        %v698 = vmul.f32 %v595, %v696
        %v699 = vmul.f32 %v596, %v696
        %v700 = vmul.f32 %v597, %v696
        %v701 = vmul.f32 %v598, %v696
        %v702 = vmul.f32 %v599, %v696
        %v703 = vmul.f32 %v600, %v696
        %v704 = vmul.f32 %v601, %v696
        %713 = vrot.lane.b32.xlu0 %v697, 126
        %v714 = vpop.permute.xlu0 %713
        %715 = vrot.lane.b32.xlu0 %v698, 126
        %v716 = vpop.permute.xlu0 %715
        %717 = vrot.lane.b32.xlu0 %v699, 126
        %v718 = vpop.permute.xlu0 %717
        %719 = vrot.lane.b32.xlu0 %v700, 126
        %v720 = vpop.permute.xlu0 %719
        %721 = vrot.lane.b32.xlu0 %v701, 126
        %v722 = vpop.permute.xlu0 %721
        %723 = vrot.lane.b32.xlu0 %v702, 126
        %v724 = vpop.permute.xlu0 %723
        %725 = vrot.lane.b32.xlu0 %v703, 126
        %v726 = vpop.permute.xlu0 %725
        %727 = vrot.lane.b32.xlu0 %v704, 126
        %v728 = vpop.permute.xlu0 %727
        %v737 = vadd.f32 %v688, %v714
        %v738 = vadd.f32 %v689, %v716
        %v739 = vadd.f32 %v690, %v718
        %v740 = vadd.f32 %v691, %v720
        %v741 = vadd.f32 %v692, %v722
        %v742 = vadd.f32 %v693, %v724
        %v743 = vadd.f32 %v694, %v726
        %v744 = vadd.f32 %v695, %v728
        %v745 = vperm.slane %v629, 3
        %v746 = vmul.f32 %v594, %v745
        %v747 = vmul.f32 %v595, %v745
        %v748 = vmul.f32 %v596, %v745
        %v749 = vmul.f32 %v597, %v745
        %v750 = vmul.f32 %v598, %v745
        %v751 = vmul.f32 %v599, %v745
        %v752 = vmul.f32 %v600, %v745
        %v753 = vmul.f32 %v601, %v745
        %762 = vrot.lane.b32.xlu0 %v746, 125
        %v763 = vpop.permute.xlu0 %762
        %764 = vrot.lane.b32.xlu0 %v747, 125
        %v765 = vpop.permute.xlu0 %764
        %766 = vrot.lane.b32.xlu0 %v748, 125
        %v767 = vpop.permute.xlu0 %766
        %768 = vrot.lane.b32.xlu0 %v749, 125
        %v769 = vpop.permute.xlu0 %768
        %770 = vrot.lane.b32.xlu0 %v750, 125
        %v771 = vpop.permute.xlu0 %770
        %772 = vrot.lane.b32.xlu0 %v751, 125
        %v773 = vpop.permute.xlu0 %772
        %774 = vrot.lane.b32.xlu0 %v752, 125
        %v775 = vpop.permute.xlu0 %774
        %776 = vrot.lane.b32.xlu0 %v753, 125
        %v777 = vpop.permute.xlu0 %776
        %v786 = vadd.f32 %v737, %v763
        %v787 = vadd.f32 %v738, %v765
        %v788 = vadd.f32 %v739, %v767
        %v789 = vadd.f32 %v740, %v769
        %v790 = vadd.f32 %v741, %v771
        %v791 = vadd.f32 %v742, %v773
        %v792 = vadd.f32 %v743, %v775
        %v793 = vadd.f32 %v744, %v777
        %v794 = vxor.u32 %v786, 2147483648
        %v795 = vxor.u32 %v787, 2147483648
        %v796 = vxor.u32 %v788, 2147483648
        %v797 = vxor.u32 %v789, 2147483648
        %v798 = vxor.u32 %v790, 2147483648
        %v799 = vxor.u32 %v791, 2147483648
        %v800 = vxor.u32 %v792, 2147483648
        %v801 = vxor.u32 %v793, 2147483648
        %v802 = vmul.f32 %v794, 1.442695
        %v803 = vpow.pop %v802
        %v804 = vmul.f32 %v795, 1.442695
        %v805 = vpow.pop %v804
        %v806 = vmul.f32 %v796, 1.442695
        %v807 = vpow.pop %v806
        %v808 = vmul.f32 %v797, 1.442695
        %v809 = vpow.pop %v808
        %v810 = vmul.f32 %v798, 1.442695
        %v811 = vpow.pop %v810
        %v812 = vmul.f32 %v799, 1.442695
        %v813 = vpow.pop %v812
        %v814 = vmul.f32 %v800, 1.442695
        %v815 = vpow.pop %v814
        %v816 = vmul.f32 %v801, 1.442695
        %v817 = vpow.pop %v816
        %v818 = vadd.f32 %v803, 1.0
        %v819 = vadd.f32 %v805, 1.0
        %v820 = vadd.f32 %v807, 1.0
        %v821 = vadd.f32 %v809, 1.0
        %v822 = vadd.f32 %v811, 1.0
        %v823 = vadd.f32 %v813, 1.0
        %v824 = vadd.f32 %v815, 1.0
        %v825 = vadd.f32 %v817, 1.0
        %v826 = vrcp.pop %v818
        %v827 = vmul.f32 %v818, %v826
        %v828 = vsub.f32 1.0, %v827
        %v829 = vmul.f32 %v826, %v828
        %v830 = vadd.f32 %v826, %v829
        %vm831 = vweird.f32 %v818
        %vm832 = vweird.f32 %v826
        %vm833 = vmor %vm831, %vm832
        %v834 = vsel %vm833, %v826, %v830
        %v835 = vand.u32 2147483647, %v818
        %vm836 = vcmp.eq.f32.partialorder %v835, 8.507059e+37
        %v837 = vand.u32 %v818, 2147483648
        %v838 = vor.u32 1.1754944e-38, %v837
        %v839 = vsel %vm836, %v838, %v834
        %v840 = vmul.f32 1.0, %v839
        %v841 = vrcp.pop %v819
        %v842 = vmul.f32 %v819, %v841
        %v843 = vsub.f32 1.0, %v842
        %v844 = vmul.f32 %v841, %v843
        %v845 = vadd.f32 %v841, %v844
        %vm846 = vweird.f32 %v819
        %vm847 = vweird.f32 %v841
        %vm848 = vmor %vm846, %vm847
        %v849 = vsel %vm848, %v841, %v845
        %v850 = vand.u32 2147483647, %v819
        %vm851 = vcmp.eq.f32.partialorder %v850, 8.507059e+37
        %v852 = vand.u32 %v819, 2147483648
        %v853 = vor.u32 1.1754944e-38, %v852
        %v854 = vsel %vm851, %v853, %v849
        %v855 = vmul.f32 1.0, %v854
        %v856 = vrcp.pop %v820
        %v857 = vmul.f32 %v820, %v856
        %v858 = vsub.f32 1.0, %v857
        %v859 = vmul.f32 %v856, %v858
        %v860 = vadd.f32 %v856, %v859
        %vm861 = vweird.f32 %v820
        %vm862 = vweird.f32 %v856
        %vm863 = vmor %vm861, %vm862
        %v864 = vsel %vm863, %v856, %v860
        %v865 = vand.u32 2147483647, %v820
        %vm866 = vcmp.eq.f32.partialorder %v865, 8.507059e+37
        %v867 = vand.u32 %v820, 2147483648
        %v868 = vor.u32 1.1754944e-38, %v867
        %v869 = vsel %vm866, %v868, %v864
        %v870 = vmul.f32 1.0, %v869
        %v871 = vrcp.pop %v821
        %v872 = vmul.f32 %v821, %v871
        %v873 = vsub.f32 1.0, %v872
        %v874 = vmul.f32 %v871, %v873
        %v875 = vadd.f32 %v871, %v874
        %vm876 = vweird.f32 %v821
        %vm877 = vweird.f32 %v871
        %vm878 = vmor %vm876, %vm877
        %v879 = vsel %vm878, %v871, %v875
        %v880 = vand.u32 2147483647, %v821
        %vm881 = vcmp.eq.f32.partialorder %v880, 8.507059e+37
        %v882 = vand.u32 %v821, 2147483648
        %v883 = vor.u32 1.1754944e-38, %v882
        %v884 = vsel %vm881, %v883, %v879
        %v885 = vmul.f32 1.0, %v884
        %v886 = vrcp.pop %v822
        %v887 = vmul.f32 %v822, %v886
        %v888 = vsub.f32 1.0, %v887
        %v889 = vmul.f32 %v886, %v888
        %v890 = vadd.f32 %v886, %v889
        %vm891 = vweird.f32 %v822
        %vm892 = vweird.f32 %v886
        %vm893 = vmor %vm891, %vm892
        %v894 = vsel %vm893, %v886, %v890
        %v895 = vand.u32 2147483647, %v822
        %vm896 = vcmp.eq.f32.partialorder %v895, 8.507059e+37
        %v897 = vand.u32 %v822, 2147483648
        %v898 = vor.u32 1.1754944e-38, %v897
        %v899 = vsel %vm896, %v898, %v894
        %v900 = vmul.f32 1.0, %v899
        %v901 = vrcp.pop %v823
        %v902 = vmul.f32 %v823, %v901
        %v903 = vsub.f32 1.0, %v902
        %v904 = vmul.f32 %v901, %v903
        %v905 = vadd.f32 %v901, %v904
        %vm906 = vweird.f32 %v823
        %vm907 = vweird.f32 %v901
        %vm908 = vmor %vm906, %vm907
        %v909 = vsel %vm908, %v901, %v905
        %v910 = vand.u32 2147483647, %v823
        %vm911 = vcmp.eq.f32.partialorder %v910, 8.507059e+37
        %v912 = vand.u32 %v823, 2147483648
        %v913 = vor.u32 1.1754944e-38, %v912
        %v914 = vsel %vm911, %v913, %v909
        %v915 = vmul.f32 1.0, %v914
        %v916 = vrcp.pop %v824
        %v917 = vmul.f32 %v824, %v916
        %v918 = vsub.f32 1.0, %v917
        %v919 = vmul.f32 %v916, %v918
        %v920 = vadd.f32 %v916, %v919
        %vm921 = vweird.f32 %v824
        %vm922 = vweird.f32 %v916
        %vm923 = vmor %vm921, %vm922
        %v924 = vsel %vm923, %v916, %v920
        %v925 = vand.u32 2147483647, %v824
        %vm926 = vcmp.eq.f32.partialorder %v925, 8.507059e+37
        %v927 = vand.u32 %v824, 2147483648
        %v928 = vor.u32 1.1754944e-38, %v927
        %v929 = vsel %vm926, %v928, %v924
        %v930 = vmul.f32 1.0, %v929
        %v931 = vrcp.pop %v825
        %v932 = vmul.f32 %v825, %v931
        %v933 = vsub.f32 1.0, %v932
        %v934 = vmul.f32 %v931, %v933
        %v935 = vadd.f32 %v931, %v934
        %vm936 = vweird.f32 %v825
        %vm937 = vweird.f32 %v931
        %vm938 = vmor %vm936, %vm937
        %v939 = vsel %vm938, %v931, %v935
        %v940 = vand.u32 2147483647, %v825
        %vm941 = vcmp.eq.f32.partialorder %v940, 8.507059e+37
        %v942 = vand.u32 %v825, 2147483648
        %v943 = vor.u32 1.1754944e-38, %v942
        %v944 = vsel %vm941, %v943, %v939
        %v945 = vmul.f32 1.0, %v944
        %v946 = vld [vmem:[%s371] sm:$0xff]
        %v947 = vld [vmem:[%s371 + $0x8] sm:$0xff]
        %v948 = vld [vmem:[%s371 + $0x10] sm:$0xff]
        %v949 = vld [vmem:[%s371 + $0x18] sm:$0xff]
        %v950 = vld [vmem:[%s371 + $0x20] sm:$0xff]
        %v951 = vld [vmem:[%s371 + $0x28] sm:$0xff]
        %v952 = vld [vmem:[%s371 + $0x30] sm:$0xff]
        %v953 = vld [vmem:[%s371 + $0x38] sm:$0xff]
        %v954 = vmul.f32 %v946, %v840
        %v955 = vmul.f32 %v947, %v855
        %v956 = vmul.f32 %v948, %v870
        %v957 = vmul.f32 %v949, %v885
        %v958 = vmul.f32 %v950, %v900
        %v959 = vmul.f32 %v951, %v915
        %v960 = vmul.f32 %v952, %v930
        %v961 = vmul.f32 %v953, %v945
        %963 = vset.pattern.permute.xlu0 0
        %964 = vperm.xlu0 %963, %v954
        %v965 = vpop.permute.xlu0 %964
        %968 = vset.pattern.permute.xlu0 0
        %969 = vperm.xlu0 %968, %v955
        %v970 = vpop.permute.xlu0 %969
        %973 = vset.pattern.permute.xlu0 0
        %974 = vperm.xlu0 %973, %v956
        %v975 = vpop.permute.xlu0 %974
        %978 = vset.pattern.permute.xlu0 0
        %979 = vperm.xlu0 %978, %v957
        %v980 = vpop.permute.xlu0 %979
        %983 = vset.pattern.permute.xlu0 0
        %984 = vperm.xlu0 %983, %v958
        %v985 = vpop.permute.xlu0 %984
        %988 = vset.pattern.permute.xlu0 0
        %989 = vperm.xlu0 %988, %v959
        %v990 = vpop.permute.xlu0 %989
        %993 = vset.pattern.permute.xlu0 0
        %994 = vperm.xlu0 %993, %v960
        %v995 = vpop.permute.xlu0 %994
        %998 = vset.pattern.permute.xlu0 0
        %999 = vperm.xlu0 %998, %v961
        %v1000 = vpop.permute.xlu0 %999
        %v1002 = vmul.f32 %v546, %v965
        %v1003 = vmul.f32 %v547, %v965
        %v1004 = vmul.f32 %v548, %v970
        %v1005 = vmul.f32 %v549, %v970
        %v1006 = vmul.f32 %v550, %v975
        %v1007 = vmul.f32 %v551, %v975
        %v1008 = vmul.f32 %v552, %v980
        %v1009 = vmul.f32 %v553, %v980
        %v1010 = vmul.f32 %v554, %v985
        %v1011 = vmul.f32 %v555, %v985
        %v1012 = vmul.f32 %v556, %v990
        %v1013 = vmul.f32 %v557, %v990
        %v1014 = vmul.f32 %v558, %v995
        %v1015 = vmul.f32 %v559, %v995
        %v1016 = vmul.f32 %v560, %v1000
        %v1017 = vmul.f32 %v561, %v1000
        %vm1018 = vcmask 523264
        %v1020 = vsel %vm1018, %v610, 0
        %1022 = vmatpush.msra.mxu0 0.0
        %1023 = vmatpush.msra.mxu0 0.0
        %1024 = vmatpush.msra.mxu0 0.0
        %1025 = vmatpush.msra.mxu0 0.0
        %1026 = vmatpush.msra.mxu0 0.0
        %1027 = vmatpush.msra.mxu0 0.0
        %1028 = vmatpush.msra.mxu0 0.0
        %1029 = vmatpush.msra.mxu0 0.0
        %1030 = vmatpush.msra.mxu0 %v1016
        %1031 = vmatpush.msra.mxu0 %v1014
        %1032 = vmatpush.msra.mxu0 %v1012
        %1033 = vmatpush.msra.mxu0 %v1010
        %1034 = vmatpush.msra.mxu0 %v1008
        %1035 = vmatpush.msra.mxu0 %v1006
        %1036 = vmatpush.msra.mxu0 %v1004
        %1037 = vmatpush.msra.mxu0 %v1002
        %1038 = vmatmul.f32.gmra.mxu0 %v1020
        %v1039 = vpop.f32.mrf.mxu0
        %v1040 = vadd.f32 0.0, %v1039
        %1041 = vdwg.mxu0
        %1042 = vmatpush.msra.mxu0 0.0
        %1043 = vmatpush.msra.mxu0 0.0
        %1044 = vmatpush.msra.mxu0 0.0
        %1045 = vmatpush.msra.mxu0 0.0
        %1046 = vmatpush.msra.mxu0 0.0
        %1047 = vmatpush.msra.mxu0 0.0
        %1048 = vmatpush.msra.mxu0 0.0
        %1049 = vmatpush.msra.mxu0 0.0
        %1050 = vmatpush.msra.mxu0 %v1017
        %1051 = vmatpush.msra.mxu0 %v1015
        %1052 = vmatpush.msra.mxu0 %v1013
        %1053 = vmatpush.msra.mxu0 %v1011
        %1054 = vmatpush.msra.mxu0 %v1009
        %1055 = vmatpush.msra.mxu0 %v1007
        %1056 = vmatpush.msra.mxu0 %v1005
        %1057 = vmatpush.msra.mxu0 %v1003
        %1058 = vmatmul.f32.gmra.mxu0 %v1020
        %v1059 = vpop.f32.mrf.mxu0
        %v1060 = vadd.f32 0.0, %v1059
        %1061 = vdwg.mxu0
        %v1062 = vmul.f32 %v1002, %v1002
        %v1063 = vmul.f32 %v1003, %v1003
        %v1064 = vmul.f32 %v1004, %v1004
        %v1065 = vmul.f32 %v1005, %v1005
        %v1066 = vmul.f32 %v1006, %v1006
        %v1067 = vmul.f32 %v1007, %v1007
        %v1068 = vmul.f32 %v1008, %v1008
        %v1069 = vmul.f32 %v1009, %v1009
        %v1070 = vmul.f32 %v1010, %v1010
        %v1071 = vmul.f32 %v1011, %v1011
        %v1072 = vmul.f32 %v1012, %v1012
        %v1073 = vmul.f32 %v1013, %v1013
        %v1074 = vmul.f32 %v1014, %v1014
        %v1075 = vmul.f32 %v1015, %v1015
        %v1076 = vmul.f32 %v1016, %v1016
        %v1077 = vmul.f32 %v1017, %v1017
        %v1078 = vadd.f32 %v1062, %v1064
        %v1079 = vadd.f32 %v1078, %v1066
        %v1080 = vadd.f32 %v1079, %v1068
        %v1081 = vadd.f32 %v1080, %v1070
        %v1082 = vadd.f32 %v1081, %v1072
        %v1083 = vadd.f32 %v1082, %v1074
        %v1084 = vadd.f32 %v1083, %v1076
        %v1085 = vrot.slane %v1084, 4
        %v1086 = vadd.f32 %v1084, %v1085
        %v1087 = vrot.slane %v1086, 2
        %v1088 = vadd.f32 %v1086, %v1087
        %v1089 = vrot.slane %v1088, 1
        %v1090 = vadd.f32 %v1088, %v1089
        %v1091 = vadd.f32 %v1063, %v1065
        %v1092 = vadd.f32 %v1091, %v1067
        %v1093 = vadd.f32 %v1092, %v1069
        %v1094 = vadd.f32 %v1093, %v1071
        %v1095 = vadd.f32 %v1094, %v1073
        %v1096 = vadd.f32 %v1095, %v1075
        %v1097 = vadd.f32 %v1096, %v1077
        %v1098 = vrot.slane %v1097, 4
        %v1099 = vadd.f32 %v1097, %v1098
        %v1100 = vrot.slane %v1099, 2
        %v1101 = vadd.f32 %v1099, %v1100
        %v1102 = vrot.slane %v1101, 1
        %v1103 = vadd.f32 %v1101, %v1102
        %v1104 = vrsqrt.pop %v1090
        %v1105 = vmul.f32 %v1104, %v1090
        %v1106 = vmul.f32 %v1105, %v1104
        %v1107 = vmul.f32 0.5, %v1106
        %v1108 = vsub.f32 1.5, %v1107
        %v1109 = vmul.f32 %v1104, %v1108
        %v1110 = vmul.f32 %v1090, %v1109
        %vm1111 = vcmp.eq.f32.partialorder %v1090, inf
        %v1112 = vsel %vm1111, %v1090, %v1110
        %vm1113 = vcmp.eq.f32.partialorder %v1090, 0.0
        %v1114 = vand.u32 %v1090, 2147483648
        %v1115 = vsel %vm1113, %v1114, %v1112
        %v1116 = vrsqrt.pop %v1103
        %v1117 = vmul.f32 %v1116, %v1103
        %v1118 = vmul.f32 %v1117, %v1116
        %v1119 = vmul.f32 0.5, %v1118
        %v1120 = vsub.f32 1.5, %v1119
        %v1121 = vmul.f32 %v1116, %v1120
        %v1122 = vmul.f32 %v1103, %v1121
        %vm1123 = vcmp.eq.f32.partialorder %v1103, inf
        %v1124 = vsel %vm1123, %v1103, %v1122
        %vm1125 = vcmp.eq.f32.partialorder %v1103, 0.0
        %v1126 = vand.u32 %v1103, 2147483648
        %v1127 = vsel %vm1125, %v1126, %v1124
        %v1128 = vmax.f32 %v1115, 1e-12
        %v1129 = vmax.f32 %v1127, 1e-12
        %v1130 = vrcp.pop %v1128
        %v1131 = vrcp.pop %v1129
        %v1132 = vmul.f32 %v1040, %v1130
        %v1133 = vmul.f32 %v1060, %v1131
        %1135 = vset.pattern.permute.xlu0 0
        %1136 = vperm.xlu0 %1135, %v611
        %v1137 = vpop.permute.xlu0 %1136
        %v1139 = vperm.slane %v1137, 0
        %v1140 = vadd.f32 %v1132, %v1139
        %v1141 = vadd.f32 %v1133, %v1139
        %v1142 = vxor.u32 %v1140, 2147483648
        %v1143 = vxor.u32 %v1141, 2147483648
        %v1144 = vmul.f32 %v1142, 1.442695
        %v1145 = vpow.pop %v1144
        %v1146 = vmul.f32 %v1143, 1.442695
        %v1147 = vpow.pop %v1146
        %v1148 = vadd.f32 %v1145, 1.0
        %v1149 = vadd.f32 %v1147, 1.0
        %v1150 = vrcp.pop %v1148
        %v1151 = vmul.f32 %v1148, %v1150
        %v1152 = vsub.f32 1.0, %v1151
        %v1153 = vmul.f32 %v1150, %v1152
        %v1154 = vadd.f32 %v1150, %v1153
        %vm1155 = vweird.f32 %v1148
        %vm1156 = vweird.f32 %v1150
        %vm1157 = vmor %vm1155, %vm1156
        %v1158 = vsel %vm1157, %v1150, %v1154
        %v1159 = vand.u32 2147483647, %v1148
        %vm1160 = vcmp.eq.f32.partialorder %v1159, 8.507059e+37
        %v1161 = vand.u32 %v1148, 2147483648
        %v1162 = vor.u32 1.1754944e-38, %v1161
        %v1163 = vsel %vm1160, %v1162, %v1158
        %v1164 = vmul.f32 1.0, %v1163
        %v1165 = vrcp.pop %v1149
        %v1166 = vmul.f32 %v1149, %v1165
        %v1167 = vsub.f32 1.0, %v1166
        %v1168 = vmul.f32 %v1165, %v1167
        %v1169 = vadd.f32 %v1165, %v1168
        %vm1170 = vweird.f32 %v1149
        %vm1171 = vweird.f32 %v1165
        %vm1172 = vmor %vm1170, %vm1171
        %v1173 = vsel %vm1172, %v1165, %v1169
        %v1174 = vand.u32 2147483647, %v1149
        %vm1175 = vcmp.eq.f32.partialorder %v1174, 8.507059e+37
        %v1176 = vand.u32 %v1149, 2147483648
        %v1177 = vor.u32 1.1754944e-38, %v1176
        %v1178 = vsel %vm1175, %v1177, %v1173
        %v1179 = vmul.f32 1.0, %v1178
        %v1182 = vrot.slane %v1179, 7
        %v1183 = vsel %vm567, %v1164, %v1182
        %v1185 = vlaneseq
        %vm1186 = vcmp.ge.s32.totalorder %v1185, 0
        %vm1187 = vcmp.lt.s32.totalorder %v1185, 256
        %vm1188 = vmand %vm1186, %vm1187
        %1189 = vst.msk [vmem:[%s356] sm:$0x3] %vm1188, %v1183
        %s1190 = sand.u32 %s237, 1
        %s1191 = scalar_lea.sflag [#allocation4], %s1190
        %s1192 = sand.u32 %s237, 1
        %s1193 = smul.addr %s1192, 2
        %s1194 = scalar_lea.vmem [#allocation3], %s1193
        // Predicated region
        $region57: #{tpu_custom_call.1} parent=55 // pred_check
          %p1195 = pneg %p247
        $region58: #{tpu_custom_call.1} parent=55 // pred_check_branch
          %1197 = sbr.rel (%p1195) target = $region60
        $region59: #{tpu_custom_call.1} parent=55 // pred_region
          %1199 = vsyncadd %s1191, 0
          %s1200 = smul.addr %s25, 2
          %s1201 = scalar_lea.hbm %s9, %s1200
          %s1203 = sshll.u32 %s1194, 4
          %s1204 = int_to_ptr.vmem [resolvable:$true] %s1203
          %s1205 = sshll.u32 %s1201, 4
          %s1206 = int_to_ptr.hbm [resolvable:$true] %s1205
          %1208 = dma.vmem_to_hbm [thread:$0]  %s1204, 32, %s1206, %s1191
        $region60: #{tpu_custom_call.1} parent=55 // pred_fallthru
          _
      $region56: #{tpu_custom_call.1} parent=5 // pred_fallthru
        _
      %p1209 = scmp.le.s32.totalorder 2, %s20
      // Predicated region
      $region61: #{tpu_custom_call.1} parent=5 // pred_check
        %p1210 = pneg %p1209
      $region62: #{tpu_custom_call.1} parent=5 // pred_check_branch
        %1212 = sbr.rel (%p1210) target = $region64
      $region63: #{tpu_custom_call.1} parent=5 // pred_region
        %s1213 = ssub.s32 %s20, 2
        // Predicated region
        $region65: #{tpu_custom_call.1} parent=63 // pred_check
          %p1214 = pneg %p253
        $region66: #{tpu_custom_call.1} parent=63 // pred_check_branch
          %1216 = sbr.rel (%p1214) target = $region68
        $region67: #{tpu_custom_call.1} parent=63 // pred_region
          %s1217 = sand.u32 %s238, 1
          %s1218 = scalar_lea.sflag [#allocation4], %s1217
          %s1219 = sand.u32 %s238, 1
          %s1220 = smul.addr %s1219, 2
          %s1221 = scalar_lea.vmem [#allocation3], %s1220
          %1223 = dma.done %s1218, 32
        $region68: #{tpu_custom_call.1} parent=63 // pred_fallthru
          _
      $region64: #{tpu_custom_call.1} parent=5 // pred_fallthru
        _
    $region6: #{tpu_custom_call.1} parent=1 // loop_footer
      %s24 = sadd.s32 1, %s20
    $region7: #{tpu_custom_call.1} parent=1 // loop_footer_branch
      %19 = sbr.rel target = $region3
    $region8: #{tpu_custom_call.1} parent=1 // loop_exit
      _
    %1224 = vsyncpa [#allocation4], 1
    %s1225 = scalar_lea.sflag [#allocation4], 1
    %1226 = vsyncpa %s1225, 1

</llo_original>
